<compile_context>
chip_gen: v7x
topology: tpu7x:2x2x1
jax: 0.10.0
libtpu: 0.0.40
codegen_flags: <defaults>
</compile_context>

<pallas_src>
import functools

import jax
import jax.numpy as jnp
from jax.experimental import pallas as pl
from jax.experimental.pallas import tpu as pltpu

LANES = 128


def _round_down_mult(x: int, m: int) -> int:
    return (int(x) // m) * m


def _nmse_partials_kernel(p_ref, t_ref, o_ref, ssd_acc, st_acc, st2_acc, *,
                          rows_total: int, tile_rows: int,
                          blocks_per_core: int, need_mask: bool):
    c = pl.program_id(0)   # core-split axis ("parallel")
    i = pl.program_id(1)   # streaming / reduction axis ("arbitrary")

    @pl.when(i == 0)
    def _init():
        ssd_acc[...] = jnp.zeros_like(ssd_acc)
        st_acc[...] = jnp.zeros_like(st_acc)
        st2_acc[...] = jnp.zeros_like(st2_acc)

    p = p_ref[...].astype(jnp.float32)
    t = t_ref[...].astype(jnp.float32)

    if need_mask:
        # Global row index of each element's row; rows past the true extent
        # (partial last block, clamped duplicate blocks, idle core) are zeroed.
        row0 = (c * blocks_per_core + i) * tile_rows
        row_ids = jax.lax.broadcasted_iota(jnp.int32, p.shape, 0) + row0
        valid = row_ids < rows_total
        p = jnp.where(valid, p, 0.0)
        t = jnp.where(valid, t, 0.0)

    # Pure elementwise VPU work per step -> hides under the input DMA.
    d = p - t
    ssd_acc[...] += d * d
    st_acc[...] += t
    st2_acc[...] += t * t

    @pl.when(i == blocks_per_core - 1)
    def _finalize():
        # One-time cross-lane reductions; write per-core partial sums as
        # full (8, 128) broadcast blocks (lane-dense, unmasked stores).
        o_ref[0, 0, :, :] = jnp.full((8, LANES), jnp.sum(ssd_acc[...]), jnp.float32)
        o_ref[0, 1, :, :] = jnp.full((8, LANES), jnp.sum(st_acc[...]), jnp.float32)
        o_ref[0, 2, :, :] = jnp.full((8, LANES), jnp.sum(st2_acc[...]), jnp.float32)


def nmse_loss(prediction: jax.Array, target: jax.Array, *, tile_rows: int = 2048) -> jax.Array:
    assert prediction.shape == target.shape, "prediction/target shape mismatch"
    n = prediction.size
    assert n > 0, "empty input"

    # Stream native dtype; cast to f32 happens inside the kernel so bf16/f16
    # inputs move half the HBM bytes.
    p = prediction.reshape(-1)
    t = target.reshape(-1)

    # Pad only a tiny (<128 element) tail so the flat array reshapes to a
    # lane-dense (rows, 128) slab.  The zero pad contributes 0 to every sum.
    rem = n % LANES
    if rem:
        p = jnp.pad(p, (0, LANES - rem))
        t = jnp.pad(t, (0, LANES - rem))
    rows = p.size // LANES
    p = p.reshape(rows, LANES)
    t = t.reshape(rows, LANES)

    # Legal row tile: a multiple of 8, or the full row extent for small inputs
    # (block_shape equal to the array dim is always allowed).
    tile_rows = max(8, _round_down_mult(tile_rows, 8))
    tile_rows = min(tile_rows, rows)

    num_blocks = pl.cdiv(rows, tile_rows)
    num_cores = 2                                  # megacore split on v7x; harmless on 1-TC chips
    blocks_per_core = pl.cdiv(num_blocks, num_cores)
    need_mask = (num_cores * blocks_per_core * tile_rows) != rows

    def in_index_map(c, i):
        b = c * blocks_per_core + i
        # Clamp out-of-range logical blocks onto the last real block; their
        # contribution is fully masked out inside the kernel.
        return (jnp.minimum(b, num_blocks - 1), 0)

    kernel = functools.partial(
        _nmse_partials_kernel,
        rows_total=rows, tile_rows=tile_rows,
        blocks_per_core=blocks_per_core, need_mask=need_mask)

    bytes_in = n * (prediction.dtype.itemsize + target.dtype.itemsize)
    cost = pl.CostEstimate(flops=6 * n, transcendentals=0, bytes_accessed=bytes_in)

    partials = pl.pallas_call(
        kernel,
        out_shape=jax.ShapeDtypeStruct((num_cores, 3, 8, LANES), jnp.float32),
        grid_spec=pltpu.PrefetchScalarGridSpec(
            num_scalar_prefetch=0,
            grid=(num_cores, blocks_per_core),
            in_specs=[
                pl.BlockSpec((tile_rows, LANES), in_index_map),
                pl.BlockSpec((tile_rows, LANES), in_index_map),
            ],
            out_specs=pl.BlockSpec((1, 3, 8, LANES), lambda c, i: (c, 0, 0, 0)),
            scratch_shapes=[
                pltpu.VMEM((tile_rows, LANES), jnp.float32),   # sum (p - t)^2
                pltpu.VMEM((tile_rows, LANES), jnp.float32),   # sum t
                pltpu.VMEM((tile_rows, LANES), jnp.float32),   # sum t^2
            ],
        ),
        compiler_params=pltpu.CompilerParams(
            dimension_semantics=("parallel", "arbitrary"),
        ),
        cost_estimate=cost,
    )(p, t)

    # Tiny cross-core combine + final scalar math in the wrapper.
    sums = partials[:, :, 0, 0].sum(axis=0)        # [sum (p-t)^2, sum t, sum t^2]
    inv_n = jnp.float32(1.0 / n)
    mse = sums[0] * inv_n
    mean_t = sums[1] * inv_n
    var = sums[2] * inv_n - mean_t * mean_t        # torch.var(unbiased=False)
    return mse / var


def _reference_nmse(prediction, target):
    pred = prediction.astype(jnp.float32)
    tgt = target.astype(jnp.float32)
    mse = jnp.mean((pred - tgt) ** 2)
    var = jnp.mean((tgt - jnp.mean(tgt)) ** 2)
    return mse / var


if __name__ == "__main__":
    key = jax.random.PRNGKey(0)
    kp, kt, kp2, kt2 = jax.random.split(key, 4)

    # Main check: small shape consistent with the module's generic
    # (prediction, target) inputs.
    shape = (2, 4, 16, 16)
    prediction = jax.random.normal(kp, shape, dtype=jnp.float32)
    target = jax.random.normal(kt, shape, dtype=jnp.float32)

    result = nmse_loss(prediction, target)
    jax.block_until_ready(result)
    ref = _reference_nmse(prediction, target)
    assert jnp.allclose(result, ref, rtol=1e-4, atol=1e-6), (result, ref)

    # Ragged / multi-block / masked path (size not a multiple of 128, small tile
    # so both the core split and the partial-last-block mask are exercised).
    shape2 = (7, 300)
    prediction2 = jax.random.normal(kp2, shape2, dtype=jnp.float32)
    target2 = jax.random.normal(kt2, shape2, dtype=jnp.float32) + 0.5
    result2 = nmse_loss(prediction2, target2, tile_rows=8)
    jax.block_until_ready(result2)
    ref2 = _reference_nmse(prediction2, target2)
    assert jnp.allclose(result2, ref2, rtol=1e-4, atol=1e-6), (result2, ref2)

    print("KERNEL_OK")
</pallas_src>

<mosaic_0001>
module attributes {stable_mosaic.version = 11 : i64} {
  func.func @_nmse_partials_kernel(%arg0: i32, %arg1: i32, %arg2: memref<16x128xf32, #tpu.memory_space<vmem>>, %arg3: memref<16x128xf32, #tpu.memory_space<vmem>>, %arg4: memref<1x3x8x128xf32, #tpu.memory_space<vmem>>, %arg5: memref<16x128xf32, #tpu.memory_space<vmem>>, %arg6: memref<16x128xf32, #tpu.memory_space<vmem>>, %arg7: memref<16x128xf32, #tpu.memory_space<vmem>>) attributes {dimension_semantics = [#tpu.dimension_semantics<parallel>, #tpu.dimension_semantics<arbitrary>], iteration_bounds = array<i64: 2, 1>, scalar_prefetch = 0 : i64, scratch_operands = 3 : i64, tpu.core_type = #tpu.core_type<tc>, window_params = [{transform_indices = @transform_0, window_bounds = array<i64: 16, 128>}, {transform_indices = @transform_1, window_bounds = array<i64: 16, 128>}, {transform_indices = @transform_2, window_bounds = array<i64: 1, 3, 8, 128>}]} {
    %c0_i32 = arith.constant 0 : i32
    %0 = arith.cmpi eq, %arg1, %c0_i32 : i32
    %1 = arith.extui %0 : i1 to i32
    %c0_i32_0 = arith.constant 0 : i32
    %2 = arith.cmpi ne, %1, %c0_i32_0 : i32
    scf.if %2 {
      %cst_20 = arith.constant 0.000000e+00 : f32
      %32 = vector.broadcast %cst_20 : f32 to vector<16x128xf32>
      %c0_21 = arith.constant 0 : index
      %c0_22 = arith.constant 0 : index
      %33 = vector.load %arg5[%c0_21, %c0_22] : memref<16x128xf32, #tpu.memory_space<vmem>>, vector<16x128xf32>
      tpu.vector_store %arg5[%c0_21, %c0_22], %32 {strides = array<i32>} : memref<16x128xf32, #tpu.memory_space<vmem>>, vector<16x128xf32>,
      %cst_23 = arith.constant 0.000000e+00 : f32
      %34 = vector.broadcast %cst_23 : f32 to vector<16x128xf32>
      %c0_24 = arith.constant 0 : index
      %c0_25 = arith.constant 0 : index
      %35 = vector.load %arg6[%c0_24, %c0_25] : memref<16x128xf32, #tpu.memory_space<vmem>>, vector<16x128xf32>
      tpu.vector_store %arg6[%c0_24, %c0_25], %34 {strides = array<i32>} : memref<16x128xf32, #tpu.memory_space<vmem>>, vector<16x128xf32>,
      %cst_26 = arith.constant 0.000000e+00 : f32
      %36 = vector.broadcast %cst_26 : f32 to vector<16x128xf32>
      %c0_27 = arith.constant 0 : index
      %c0_28 = arith.constant 0 : index
      %37 = vector.load %arg7[%c0_27, %c0_28] : memref<16x128xf32, #tpu.memory_space<vmem>>, vector<16x128xf32>
      tpu.vector_store %arg7[%c0_27, %c0_28], %36 {strides = array<i32>} : memref<16x128xf32, #tpu.memory_space<vmem>>, vector<16x128xf32>,
    } else {
    }
    %c0 = arith.constant 0 : index
    %c0_1 = arith.constant 0 : index
    %3 = vector.load %arg2[%c0, %c0_1] : memref<16x128xf32, #tpu.memory_space<vmem>>, vector<16x128xf32>
    %c0_2 = arith.constant 0 : index
    %c0_3 = arith.constant 0 : index
    %4 = vector.load %arg3[%c0_2, %c0_3] : memref<16x128xf32, #tpu.memory_space<vmem>>, vector<16x128xf32>
    %c1_i32 = arith.constant 1 : i32
    %5 = arith.muli %arg0, %c1_i32 : i32
    %6 = arith.addi %5, %arg1 : i32
    %c16_i32 = arith.constant 16 : i32
    %7 = arith.muli %6, %c16_i32 : i32
    %8 = tpu.iota {dimensions = array<i32: 0>} : vector<16x128xi32>
    %9 = vector.broadcast %7 : i32 to vector<16x128xi32>
    %10 = arith.addi %8, %9 : vector<16x128xi32>
    %c16_i32_4 = arith.constant 16 : i32
    %11 = vector.broadcast %c16_i32_4 : i32 to vector<16x128xi32>
    %12 = arith.cmpi slt, %10, %11 : vector<16x128xi32>
    %cst = arith.constant 0.000000e+00 : f32
    %13 = vector.broadcast %cst : f32 to vector<16x128xf32>
    %14 = arith.select %12, %3, %13 : vector<16x128xi1>, vector<16x128xf32>
    %cst_5 = arith.constant 0.000000e+00 : f32
    %15 = vector.broadcast %cst_5 : f32 to vector<16x128xf32>
    %16 = arith.select %12, %4, %15 : vector<16x128xi1>, vector<16x128xf32>
    %17 = arith.subf %14, %16 : vector<16x128xf32>
    %c0_6 = arith.constant 0 : index
    %c0_7 = arith.constant 0 : index
    %18 = vector.load %arg5[%c0_6, %c0_7] : memref<16x128xf32, #tpu.memory_space<vmem>>, vector<16x128xf32>
    %19 = arith.mulf %17, %17 : vector<16x128xf32>
    %20 = arith.addf %18, %19 : vector<16x128xf32>
    %c0_8 = arith.constant 0 : index
    %c0_9 = arith.constant 0 : index
    %21 = vector.load %arg5[%c0_8, %c0_9] : memref<16x128xf32, #tpu.memory_space<vmem>>, vector<16x128xf32>
    tpu.vector_store %arg5[%c0_8, %c0_9], %20 {strides = array<i32>} : memref<16x128xf32, #tpu.memory_space<vmem>>, vector<16x128xf32>,
    %c0_10 = arith.constant 0 : index
    %c0_11 = arith.constant 0 : index
    %22 = vector.load %arg6[%c0_10, %c0_11] : memref<16x128xf32, #tpu.memory_space<vmem>>, vector<16x128xf32>
    %23 = arith.addf %22, %16 : vector<16x128xf32>
    %c0_12 = arith.constant 0 : index
    %c0_13 = arith.constant 0 : index
    %24 = vector.load %arg6[%c0_12, %c0_13] : memref<16x128xf32, #tpu.memory_space<vmem>>, vector<16x128xf32>
    tpu.vector_store %arg6[%c0_12, %c0_13], %23 {strides = array<i32>} : memref<16x128xf32, #tpu.memory_space<vmem>>, vector<16x128xf32>,
    %c0_14 = arith.constant 0 : index
    %c0_15 = arith.constant 0 : index
    %25 = vector.load %arg7[%c0_14, %c0_15] : memref<16x128xf32, #tpu.memory_space<vmem>>, vector<16x128xf32>
    %26 = arith.mulf %16, %16 : vector<16x128xf32>
    %27 = arith.addf %25, %26 : vector<16x128xf32>
    %c0_16 = arith.constant 0 : index
    %c0_17 = arith.constant 0 : index
    %28 = vector.load %arg7[%c0_16, %c0_17] : memref<16x128xf32, #tpu.memory_space<vmem>>, vector<16x128xf32>
    tpu.vector_store %arg7[%c0_16, %c0_17], %27 {strides = array<i32>} : memref<16x128xf32, #tpu.memory_space<vmem>>, vector<16x128xf32>,
    %c0_i32_18 = arith.constant 0 : i32
    %29 = arith.cmpi eq, %arg1, %c0_i32_18 : i32
    %30 = arith.extui %29 : i1 to i32
    %c0_i32_19 = arith.constant 0 : i32
    %31 = arith.cmpi ne, %30, %c0_i32_19 : i32
    scf.if %31 {
      %c0_20 = arith.constant 0 : index
      %c0_21 = arith.constant 0 : index
      %32 = vector.load %arg5[%c0_20, %c0_21] : memref<16x128xf32, #tpu.memory_space<vmem>>, vector<16x128xf32>
      %33 = vector.shape_cast %32 : vector<16x128xf32> to vector<1x16x128xf32>
      %cst_22 = arith.constant dense<0.000000e+00> : vector<1xf32>
      %34 = vector.multi_reduction <add>, %33, %cst_22 [1, 2] : vector<1x16x128xf32> to vector<1xf32>
      %35 = vector.shape_cast %34 : vector<1xf32> to vector<1x1x1xf32>
      %36 = vector.extract %35[0, 0, 0] : f32 from vector<1x1x1xf32>
      %37 = vector.broadcast %36 : f32 to vector<8x128xf32>
      %c0_23 = arith.constant 0 : index
      %c0_24 = arith.constant 0 : index
      %c0_25 = arith.constant 0 : index
      %c0_26 = arith.constant 0 : index
      %38 = vector.load %arg4[%c0_23, %c0_24, %c0_25, %c0_26] : memref<1x3x8x128xf32, #tpu.memory_space<vmem>>, vector<1x1x8x128xf32>
      %39 = vector.shape_cast %38 : vector<1x1x8x128xf32> to vector<8x128xf32>
      %40 = vector.shape_cast %37 : vector<8x128xf32> to vector<1x1x8x128xf32>
      tpu.vector_store %arg4[%c0_23, %c0_24, %c0_25, %c0_26], %40 {strides = array<i32>} : memref<1x3x8x128xf32, #tpu.memory_space<vmem>>, vector<1x1x8x128xf32>,
      %c0_27 = arith.constant 0 : index
      %c0_28 = arith.constant 0 : index
      %41 = vector.load %arg6[%c0_27, %c0_28] : memref<16x128xf32, #tpu.memory_space<vmem>>, vector<16x128xf32>
      %42 = vector.shape_cast %41 : vector<16x128xf32> to vector<1x16x128xf32>
      %cst_29 = arith.constant dense<0.000000e+00> : vector<1xf32>
      %43 = vector.multi_reduction <add>, %42, %cst_29 [1, 2] : vector<1x16x128xf32> to vector<1xf32>
      %44 = vector.shape_cast %43 : vector<1xf32> to vector<1x1x1xf32>
      %45 = vector.extract %44[0, 0, 0] : f32 from vector<1x1x1xf32>
      %46 = vector.broadcast %45 : f32 to vector<8x128xf32>
      %c0_30 = arith.constant 0 : index
      %c1 = arith.constant 1 : index
      %c0_31 = arith.constant 0 : index
      %c0_32 = arith.constant 0 : index
      %47 = vector.load %arg4[%c0_30, %c1, %c0_31, %c0_32] : memref<1x3x8x128xf32, #tpu.memory_space<vmem>>, vector<1x1x8x128xf32>
      %48 = vector.shape_cast %47 : vector<1x1x8x128xf32> to vector<8x128xf32>
      %49 = vector.shape_cast %46 : vector<8x128xf32> to vector<1x1x8x128xf32>
      tpu.vector_store %arg4[%c0_30, %c1, %c0_31, %c0_32], %49 {strides = array<i32>} : memref<1x3x8x128xf32, #tpu.memory_space<vmem>>, vector<1x1x8x128xf32>,
      %c0_33 = arith.constant 0 : index
      %c0_34 = arith.constant 0 : index
      %50 = vector.load %arg7[%c0_33, %c0_34] : memref<16x128xf32, #tpu.memory_space<vmem>>, vector<16x128xf32>
      %51 = vector.shape_cast %50 : vector<16x128xf32> to vector<1x16x128xf32>
      %cst_35 = arith.constant dense<0.000000e+00> : vector<1xf32>
      %52 = vector.multi_reduction <add>, %51, %cst_35 [1, 2] : vector<1x16x128xf32> to vector<1xf32>
      %53 = vector.shape_cast %52 : vector<1xf32> to vector<1x1x1xf32>
      %54 = vector.extract %53[0, 0, 0] : f32 from vector<1x1x1xf32>
      %55 = vector.broadcast %54 : f32 to vector<8x128xf32>
      %c0_36 = arith.constant 0 : index
      %c2 = arith.constant 2 : index
      %c0_37 = arith.constant 0 : index
      %c0_38 = arith.constant 0 : index
      %56 = vector.load %arg4[%c0_36, %c2, %c0_37, %c0_38] : memref<1x3x8x128xf32, #tpu.memory_space<vmem>>, vector<1x1x8x128xf32>
      %57 = vector.shape_cast %56 : vector<1x1x8x128xf32> to vector<8x128xf32>
      %58 = vector.shape_cast %55 : vector<8x128xf32> to vector<1x1x8x128xf32>
      tpu.vector_store %arg4[%c0_36, %c2, %c0_37, %c0_38], %58 {strides = array<i32>} : memref<1x3x8x128xf32, #tpu.memory_space<vmem>>, vector<1x1x8x128xf32>,
    } else {
    }
    return
  }
  func.func @transform_0(%arg0: i32, %arg1: i32) -> (i32, i32) {
    %c1_i32 = arith.constant 1 : i32
    %0 = arith.muli %arg0, %c1_i32 : i32
    %1 = arith.addi %0, %arg1 : i32
    %c0_i32 = arith.constant 0 : i32
    %2 = arith.minsi %1, %c0_i32 : i32
    %c0_i32_0 = arith.constant 0 : i32
    %c0_i32_1 = arith.constant 0 : i32
    return %2, %c0_i32_0 : i32, i32
  }
  func.func @transform_1(%arg0: i32, %arg1: i32) -> (i32, i32) {
    %c1_i32 = arith.constant 1 : i32
    %0 = arith.muli %arg0, %c1_i32 : i32
    %1 = arith.addi %0, %arg1 : i32
    %c0_i32 = arith.constant 0 : i32
    %2 = arith.minsi %1, %c0_i32 : i32
    %c0_i32_0 = arith.constant 0 : i32
    %c0_i32_1 = arith.constant 0 : i32
    return %2, %c0_i32_0 : i32, i32
  }
  func.func @transform_2(%arg0: i32, %arg1: i32) -> (i32, i32, i32, i32) {
    %c0_i32 = arith.constant 0 : i32
    %c0_i32_0 = arith.constant 0 : i32
    %c0_i32_1 = arith.constant 0 : i32
    %c0_i32_2 = arith.constant 0 : i32
    return %arg0, %c0_i32, %c0_i32_0, %c0_i32_1 : i32, i32, i32, i32
  }
}

</mosaic_0001>

<llo_original>
// kernel: tpu_custom_call.1
$region0: #{tpu_custom_call.1}
  #allocation0 [shape = 'u32[]', space=smem, size = 0x4, offset = 0x4, fixed_abs, tag = 'smem constant byte address 0x4 - core index']
  #allocation1 [shape = 'u32[144,128]{1,0:T(1,128)}', space=vmem, size = 0x12000, scoped, tag = 'internal scratch']
  #allocation2 [shape = 'f32[16,128]{1,0:T(8,128)}', space=vmem, size = 0x2000, scoped, tag = 'scratch operand']
  #allocation3 [shape = 'f32[16,128]{1,0:T(8,128)}', space=vmem, size = 0x2000, scoped, tag = 'scratch operand']
  #allocation4 [shape = 'f32[16,128]{1,0:T(8,128)}', space=vmem, size = 0x2000, scoped, tag = 'scratch operand']
  %s0 = inlined_call_operand.hbm [shape: f32[16,128], index: 0, kind: input, shape index: {}]
  %s1 = inlined_call_operand.hbm [shape: f32[16,128], index: 1, kind: input, shape index: {}]
  %s2 = inlined_call_operand.hbm [shape: f32[2,3,8,128], index: 2, kind: output, shape index: {}]
  %s3 = sld [smem:[#allocation0]]
  $region57: #{tpu_custom_call.1} parent=0
    _
  %s5 = ssub.s32 1, %s3
  %s6 = scalar_select 0, %s5, %s3
  $region1: #{tpu_custom_call.1} parent=0
    #allocation5 [shape = 'u8[16384]{0}', space=vmem, size = 0x4000, scoped, tag = 'input window, operand 0']
    #allocation6 [shape = 's32[2]{0}', space=sflag, size = 0x8, scoped, tag = 'scoped memory for tpu_custom_call.1']
    #allocation7 [shape = 's32[2]{0}', space=sflag, size = 0x8, scoped, tag = 'scoped memory for tpu_custom_call.1']
    #allocation8 [shape = 'u8[16384]{0}', space=vmem, size = 0x4000, scoped, tag = 'input window, operand 1']
    #allocation9 [shape = 's32[2]{0}', space=sflag, size = 0x8, scoped, tag = 'scoped memory for tpu_custom_call.1']
    #allocation10 [shape = 'u8[24576]{0}', space=vmem, size = 0x6000, scoped, tag = 'output window, operand 0']
    %7 = vsyncpa [#allocation6], 0
    %s8 = scalar_lea.sflag [#allocation6], 1
    %9 = vsyncpa %s8, 0
    %10 = vsyncpa [#allocation9], 0
    %s11 = scalar_lea.sflag [#allocation9], 1
    %12 = vsyncpa %s11, 0
    %13 = vsyncpa [#allocation7], 0
    %s14 = scalar_lea.sflag [#allocation7], 1
    %15 = vsyncpa %s14, 0
    loop: start=0, step=1, limit=4
    $region2: #{tpu_custom_call.1} parent=1 // loop_pre_header
      _
    $region3: #{tpu_custom_call.1} parent=1 // loop_header
      %s17 = sphi 0, %s21
      %p18 = scmp.ge.s32.totalorder %s17, 4
      %s24 = sphi 0, %s36
      %s25 = sphi 0, %s32
      %s26 = sphi 0, %s24
      %s27 = sphi 0, %s25
      %s28 = sphi 0, %s26
      %s29 = sphi 0, %s27
      %s45 = sphi 0, %s47
      %s48 = sphi 0, %s45
      %s49 = sphi 0, %s48
      %s65 = sphi 0, %s49
      %s77 = sphi 0, %s79
      %s80 = sphi 0, %s77
      %s81 = sphi 0, %s80
      %s97 = sphi 0, %s81
      %s103 = sphi 0, %s105
      %s106 = sphi 0, %s103
      %s107 = sphi 0, %s106
      %s123 = sphi 0, %s107
    $region4: #{tpu_custom_call.1} parent=1 // loop_header_branch
      %20 = sbr.rel (%p18) target = $region8
    $region5: #{tpu_custom_call.1} parent=1 // loop_body
      %s22 = ssub.s32 %s17, 1
      %s23 = ssub.s32 %s17, 2
      %s30 = sadd.s32 1, %s25
      %p31 = scmp.ge.s32.totalorder %s30, 1
      %s32 = scalar_select %p31, 0, %s30
      %s33 = sadd.s32 1, %s24
      %s34 = scalar_select %p31, %s33, %s24
      %p35 = scmp.ge.s32.totalorder %s34, 2
      %s36 = scalar_select %p35, 0, %s34
      %s37 = sadd.s32 %s24, %s25
      %p38 = scmp.lt.s32.totalorder %s37, 0
      %s39 = scalar_select %p38, %s37, 0
      %s40 = sadd.s32 %s36, %s32
      %p41 = scmp.lt.s32.totalorder %s40, 0
      %s42 = scalar_select %p41, %s40, 0
      %s43 = ssub.s32 %s39, %s42
      %p44 = scmp.eq.s32.totalorder %s43, 0
      %s46 = sadd.s32 %s45, 1
      %s47 = scalar_select %p44, %s45, %s46
      %p50 = pneg %p44
      %p51 = scmp.eq.s32.totalorder %s17, 1
      %p52 = por %p50, %p51
      %p53 = scmp.ne.s32.totalorder %s45, %s48
      %p54 = scmp.eq.s32.totalorder %s17, 0
      %p55 = por %p53, %p54
      %p56 = scmp.ne.s32.totalorder %s45, %s48
      %p57 = scmp.eq.s32.totalorder %s22, 1
      %p58 = por %p56, %p57
      %p59 = scmp.ne.s32.totalorder %s48, %s49
      %p60 = scmp.eq.s32.totalorder %s22, 0
      %p61 = por %p59, %p60
      %p62 = scmp.ne.s32.totalorder %s48, %s49
      %p63 = scmp.eq.s32.totalorder %s23, 1
      %p64 = por %p62, %p63
      %p66 = scmp.ne.s32.totalorder %s49, %s65
      %p67 = scmp.eq.s32.totalorder %s23, 0
      %p68 = por %p66, %p67
      %s69 = sadd.s32 %s24, %s25
      %p70 = scmp.lt.s32.totalorder %s69, 0
      %s71 = scalar_select %p70, %s69, 0
      %s72 = sadd.s32 %s36, %s32
      %p73 = scmp.lt.s32.totalorder %s72, 0
      %s74 = scalar_select %p73, %s72, 0
      %s75 = ssub.s32 %s71, %s74
      %p76 = scmp.eq.s32.totalorder %s75, 0
      %s78 = sadd.s32 %s77, 1
      %s79 = scalar_select %p76, %s77, %s78
      %p82 = pneg %p76
      %p83 = scmp.eq.s32.totalorder %s17, 1
      %p84 = por %p82, %p83
      %p85 = scmp.ne.s32.totalorder %s77, %s80
      %p86 = scmp.eq.s32.totalorder %s17, 0
      %p87 = por %p85, %p86
      %p88 = scmp.ne.s32.totalorder %s77, %s80
      %p89 = scmp.eq.s32.totalorder %s22, 1
      %p90 = por %p88, %p89
      %p91 = scmp.ne.s32.totalorder %s80, %s81
      %p92 = scmp.eq.s32.totalorder %s22, 0
      %p93 = por %p91, %p92
      %p94 = scmp.ne.s32.totalorder %s80, %s81
      %p95 = scmp.eq.s32.totalorder %s23, 1
      %p96 = por %p94, %p95
      %p98 = scmp.ne.s32.totalorder %s81, %s97
      %p99 = scmp.eq.s32.totalorder %s23, 0
      %p100 = por %p98, %p99
      %s101 = ssub.s32 %s24, %s36
      %p102 = scmp.eq.s32.totalorder %s101, 0
      %s104 = sadd.s32 %s103, 1
      %s105 = scalar_select %p102, %s103, %s104
      %p108 = pneg %p102
      %p109 = scmp.eq.s32.totalorder %s17, 1
      %p110 = por %p108, %p109
      %p111 = scmp.ne.s32.totalorder %s103, %s106
      %p112 = scmp.eq.s32.totalorder %s17, 0
      %p113 = por %p111, %p112
      %p114 = scmp.ne.s32.totalorder %s103, %s106
      %p115 = scmp.eq.s32.totalorder %s22, 1
      %p116 = por %p114, %p115
      %p117 = scmp.ne.s32.totalorder %s106, %s107
      %p118 = scmp.eq.s32.totalorder %s22, 0
      %p119 = por %p117, %p118
      %p120 = scmp.ne.s32.totalorder %s106, %s107
      %p121 = scmp.eq.s32.totalorder %s23, 1
      %p122 = por %p120, %p121
      %p124 = scmp.ne.s32.totalorder %s107, %s123
      %p125 = scmp.eq.s32.totalorder %s23, 0
      %p126 = por %p124, %p125
      %p127 = scmp.le.s32.totalorder 1, %s17
      %p128 = scmp.lt.s32.totalorder %s17, 3
      %p129 = pnand %p127, %p128
      %p130 = pneg %p129
      // Predicated region
      $region9: #{tpu_custom_call.1} parent=5 // pred_check
        _
      $region10: #{tpu_custom_call.1} parent=5 // pred_check_branch
        %132 = sbr.rel (%p129) target = $region12
      $region11: #{tpu_custom_call.1} parent=5 // pred_region
        %s133 = ssub.s32 %s17, 1
      $region12: #{tpu_custom_call.1} parent=5 // pred_fallthru
        _
      %p134 = scmp.lt.s32.totalorder %s17, 2
      // Predicated region
      $region13: #{tpu_custom_call.1} parent=5 // pred_check
        %p135 = pneg %p134
      $region14: #{tpu_custom_call.1} parent=5 // pred_check_branch
        %137 = sbr.rel (%p135) target = $region16
      $region15: #{tpu_custom_call.1} parent=5 // pred_region
        // Predicated region
        $region17: #{tpu_custom_call.1} parent=15 // pred_check
          %p138 = pneg %p55
        $region18: #{tpu_custom_call.1} parent=15 // pred_check_branch
          %140 = sbr.rel (%p138) target = $region20
        $region19: #{tpu_custom_call.1} parent=15 // pred_region
          %s141 = sand.u32 %s45, 1
          %s142 = scalar_lea.sflag [#allocation6], %s141
          %s143 = sand.u32 %s45, 1
          %s144 = smul.addr %s143, 16
          %s145 = scalar_lea.vmem [#allocation5], %s144
          %s146 = sadd.s32 %s24, %s25
          %p147 = scmp.lt.s32.totalorder %s146, 0
          %s148 = scalar_select %p147, %s146, 0
          %s149 = smul.u32 2, %s148
          %s151 = ssub.s32 256, 256
          %152 = vsyncadd %s142, %s151
          %s153 = smul.addr %s149, 128
          %s154 = scalar_lea.hbm %s0, %s153
          %s155 = sshll.u32 %s145, 4
          %s156 = int_to_ptr.vmem [resolvable:$true] %s155
          %161 = dma.hbm_to_vmem [thread:$0]  %s154, 256, %s156, %s142, 128, 128, 8
        $region20: #{tpu_custom_call.1} parent=15 // pred_fallthru
          _
        // Predicated region
        $region21: #{tpu_custom_call.1} parent=15 // pred_check
          %p162 = pneg %p87
        $region22: #{tpu_custom_call.1} parent=15 // pred_check_branch
          %164 = sbr.rel (%p162) target = $region24
        $region23: #{tpu_custom_call.1} parent=15 // pred_region
          %s165 = sand.u32 %s77, 1
          %s166 = scalar_lea.sflag [#allocation9], %s165
          %s167 = sand.u32 %s77, 1
          %s168 = smul.addr %s167, 16
          %s169 = scalar_lea.vmem [#allocation8], %s168
          %s170 = sadd.s32 %s24, %s25
          %p171 = scmp.lt.s32.totalorder %s170, 0
          %s172 = scalar_select %p171, %s170, 0
          %s173 = smul.u32 2, %s172
          %s175 = ssub.s32 256, 256
          %176 = vsyncadd %s166, %s175
          %s177 = smul.addr %s173, 128
          %s178 = scalar_lea.hbm %s1, %s177
          %s179 = sshll.u32 %s169, 4
          %s180 = int_to_ptr.vmem [resolvable:$true] %s179
          %185 = dma.hbm_to_vmem [thread:$0]  %s178, 256, %s180, %s166, 128, 128, 8
        $region24: #{tpu_custom_call.1} parent=15 // pred_fallthru
          _
      $region16: #{tpu_custom_call.1} parent=5 // pred_fallthru
        _
      %p186 = scmp.le.s32.totalorder 1, %s17
      %p187 = scmp.lt.s32.totalorder %s17, 3
      %p188 = pnand %p186, %p187
      %p189 = pneg %p188
      // Predicated region
      $region25: #{tpu_custom_call.1} parent=5 // pred_check
        _
      $region26: #{tpu_custom_call.1} parent=5 // pred_check_branch
        %191 = sbr.rel (%p188) target = $region28
      $region27: #{tpu_custom_call.1} parent=5 // pred_region
        %s192 = ssub.s32 %s17, 1
        %s193 = sand.u32 %s48, 1
        %s194 = scalar_lea.sflag [#allocation6], %s193
        %s195 = sand.u32 %s48, 1
        %s196 = smul.addr %s195, 16
        %s197 = scalar_lea.vmem [#allocation5], %s196
        // Predicated region
        $region29: #{tpu_custom_call.1} parent=27 // pred_check
          %p198 = pneg %p61
        $region30: #{tpu_custom_call.1} parent=27 // pred_check_branch
          %200 = sbr.rel (%p198) target = $region32
        $region31: #{tpu_custom_call.1} parent=27 // pred_region
          %201 = dma.done %s194, 256
        $region32: #{tpu_custom_call.1} parent=27 // pred_fallthru
          _
        %s202 = sand.u32 %s80, 1
        %s203 = scalar_lea.sflag [#allocation9], %s202
        %s204 = sand.u32 %s80, 1
        %s205 = smul.addr %s204, 16
        %s206 = scalar_lea.vmem [#allocation8], %s205
        // Predicated region
        $region33: #{tpu_custom_call.1} parent=27 // pred_check
          %p207 = pneg %p93
        $region34: #{tpu_custom_call.1} parent=27 // pred_check_branch
          %209 = sbr.rel (%p207) target = $region36
        $region35: #{tpu_custom_call.1} parent=27 // pred_region
          %210 = dma.done %s203, 256
        $region36: #{tpu_custom_call.1} parent=27 // pred_fallthru
          _
        %s211 = sand.u32 %s48, 1
        %s212 = scalar_lea.sflag [#allocation6], %s211
        %s213 = sand.u32 %s48, 1
        %s214 = smul.addr %s213, 16
        %s215 = scalar_lea.vmem [#allocation5], %s214
        %p216 = pneg %p61
        %p217 = pneg %p58
        %s218 = sand.u32 %s80, 1
        %s219 = scalar_lea.sflag [#allocation9], %s218
        %s220 = sand.u32 %s80, 1
        %s221 = smul.addr %s220, 16
        %s222 = scalar_lea.vmem [#allocation8], %s221
        %p223 = pneg %p93
        %p224 = pneg %p90
        %p225 = pneg %p119
        %p226 = pneg %p116
        %s227 = sand.u32 %s106, 1
        %s228 = scalar_lea.sflag [#allocation7], %s227
        %s229 = sand.u32 %s106, 1
        %s230 = smul.addr %s229, 24
        %s231 = scalar_lea.vmem [#allocation10], %s230
        %s232 = sadd.s32 %s26, %s27
        %p233 = scmp.lt.s32.totalorder %s232, 0
        %s234 = scalar_select %p233, %s232, 0
        %s235 = smul.u32 2, %s234
        %s236 = sadd.s32 %s26, %s27
        %p237 = scmp.lt.s32.totalorder %s236, 0
        %s238 = scalar_select %p237, %s236, 0
        %s239 = smul.u32 2, %s238
        %p240 = scmp.eq.s32.totalorder %s27, 0
        // Predicated region
        $region37: #{tpu_custom_call.1} parent=27 // pred_check
          %p241 = pneg %p240
        $region38: #{tpu_custom_call.1} parent=27 // pred_check_branch
          %243 = sbr.rel (%p241) target = $region40
        $region39: #{tpu_custom_call.1} parent=27 // pred_region
          %244 = vst [vmem:[#allocation2] sm:$0xff] 0.0
          %245 = vst [vmem:[#allocation2 + $0x8] sm:$0xff] 0.0
          %246 = vst [vmem:[#allocation3] sm:$0xff] 0.0
          %247 = vst [vmem:[#allocation3 + $0x8] sm:$0xff] 0.0
          %248 = vst [vmem:[#allocation4] sm:$0xff] 0.0
          %249 = vst [vmem:[#allocation4 + $0x8] sm:$0xff] 0.0
        $region40: #{tpu_custom_call.1} parent=27 // pred_fallthru
          _
        %v250 = vld [vmem:[%s197] sm:$0xff]
        %v251 = vld [vmem:[%s197 + $0x8] sm:$0xff]
        %v252 = vld [vmem:[%s206] sm:$0xff]
        %v253 = vld [vmem:[%s206 + $0x8] sm:$0xff]
        %s254 = sadd.s32 %s26, %s27
        %s255 = smul.u32 %s254, 16
        %v256 = vlaneseq
        %v257 = vshrl.u32 %v256, 7
        %v258 = vadd.s32 %v257, 8
        %v259 = vstv %s255
        %v260 = vadd.s32 %v257, %v259
        %v261 = vadd.s32 %v258, %v259
        %vm262 = vcmp.lt.s32.totalorder %v260, 16
        %vm263 = vcmp.lt.s32.totalorder %v261, 16
        %v264 = vsel %vm262, %v250, 0.0
        %v265 = vsel %vm263, %v251, 0.0
        %v266 = vsel %vm262, %v252, 0.0
        %v267 = vsel %vm263, %v253, 0.0
        %v268 = vsub.f32 %v264, %v266
        %v269 = vsub.f32 %v265, %v267
        %v270 = vld [vmem:[#allocation2] sm:$0xff]
        %v271 = vld [vmem:[#allocation2 + $0x8] sm:$0xff]
        %v272 = vmul.f32 %v268, %v268
        %v273 = vmul.f32 %v269, %v269
        %v274 = vadd.f32 %v270, %v272
        %v275 = vadd.f32 %v271, %v273
        %276 = vst [vmem:[#allocation2] sm:$0xff] %v274
        %277 = vst [vmem:[#allocation2 + $0x8] sm:$0xff] %v275
        %v278 = vld [vmem:[#allocation3] sm:$0xff]
        %v279 = vld [vmem:[#allocation3 + $0x8] sm:$0xff]
        %v280 = vadd.f32 %v278, %v266
        %v281 = vadd.f32 %v279, %v267
        %282 = vst [vmem:[#allocation3] sm:$0xff] %v280
        %283 = vst [vmem:[#allocation3 + $0x8] sm:$0xff] %v281
        %v284 = vld [vmem:[#allocation4] sm:$0xff]
        %v285 = vld [vmem:[#allocation4 + $0x8] sm:$0xff]
        %v286 = vmul.f32 %v266, %v266
        %v287 = vmul.f32 %v267, %v267
        %v288 = vadd.f32 %v284, %v286
        %v289 = vadd.f32 %v285, %v287
        %290 = vst [vmem:[#allocation4] sm:$0xff] %v288
        %291 = vst [vmem:[#allocation4 + $0x8] sm:$0xff] %v289
        // Predicated region
        $region41: #{tpu_custom_call.1} parent=27 // pred_check
          %p292 = pneg %p240
        $region42: #{tpu_custom_call.1} parent=27 // pred_check_branch
          %294 = sbr.rel (%p292) target = $region44
        $region43: #{tpu_custom_call.1} parent=27 // pred_region
          %v295 = vld [vmem:[#allocation2] sm:$0xff]
          %v296 = vld [vmem:[#allocation2 + $0x8] sm:$0xff]
          %v297 = vadd.f32 %v295, %v296
          %298 = vadd.xlane.f32.xlu0 %v297
          %v299 = vpop.xlane.xlu0 %298
          %v300 = vrot.slane %v299, 4
          %v301 = vadd.f32 %v299, %v300
          %v302 = vrot.slane %v301, 2
          %v303 = vadd.f32 %v301, %v302
          %v304 = vrot.slane %v303, 1
          %v305 = vadd.f32 %v303, %v304
          %s306 = vtos %v305
          %v307 = vstv %s306
          %308 = vst [vmem:[%s231] sm:$0xff] %v307
          %v309 = vld [vmem:[#allocation3] sm:$0xff]
          %v310 = vld [vmem:[#allocation3 + $0x8] sm:$0xff]
          %v311 = vadd.f32 %v309, %v310
          %312 = vadd.xlane.f32.xlu0 %v311
          %v313 = vpop.xlane.xlu0 %312
          %v314 = vrot.slane %v313, 4
          %v315 = vadd.f32 %v313, %v314
          %v316 = vrot.slane %v315, 2
          %v317 = vadd.f32 %v315, %v316
          %v318 = vrot.slane %v317, 1
          %v319 = vadd.f32 %v317, %v318
          %s320 = vtos %v319
          %v321 = vstv %s320
          %s322 = scalar_lea.vmem %s231, 8 [#allocation10]
          %323 = vst [vmem:[%s322] sm:$0xff] %v321
          %v324 = vld [vmem:[#allocation4] sm:$0xff]
          %v325 = vld [vmem:[#allocation4 + $0x8] sm:$0xff]
          %v326 = vadd.f32 %v324, %v325
          %327 = vadd.xlane.f32.xlu0 %v326
          %v328 = vpop.xlane.xlu0 %327
          %v329 = vrot.slane %v328, 4
          %v330 = vadd.f32 %v328, %v329
          %v331 = vrot.slane %v330, 2
          %v332 = vadd.f32 %v330, %v331
          %v333 = vrot.slane %v332, 1
          %v334 = vadd.f32 %v332, %v333
          %s335 = vtos %v334
          %v336 = vstv %s335
          %s337 = scalar_lea.vmem %s231, 16 [#allocation10]
          %338 = vst [vmem:[%s337] sm:$0xff] %v336
        $region44: #{tpu_custom_call.1} parent=27 // pred_fallthru
          _
        %s339 = sand.u32 %s106, 1
        %s340 = scalar_lea.sflag [#allocation7], %s339
        %s341 = sand.u32 %s106, 1
        %s342 = smul.addr %s341, 24
        %s343 = scalar_lea.vmem [#allocation10], %s342
        // Predicated region
        $region45: #{tpu_custom_call.1} parent=27 // pred_check
          %p344 = pneg %p116
        $region46: #{tpu_custom_call.1} parent=27 // pred_check_branch
          %346 = sbr.rel (%p344) target = $region48
        $region47: #{tpu_custom_call.1} parent=27 // pred_region
          %s348 = ssub.s32 384, 384
          %349 = vsyncadd %s340, %s348
          %s350 = smul.addr %s26, 3
          %s351 = smul.addr %s350, 128
          %s352 = scalar_lea.hbm %s2, %s351
          %s353 = sshll.u32 %s343, 4
          %s354 = int_to_ptr.vmem [resolvable:$true] %s353
          %359 = dma.vmem_to_hbm [thread:$0]  %s354, 384, %s352, %s340, 128, 128, 8
        $region48: #{tpu_custom_call.1} parent=27 // pred_fallthru
          _
      $region28: #{tpu_custom_call.1} parent=5 // pred_fallthru
        _
      %p360 = scmp.le.s32.totalorder 2, %s17
      // Predicated region
      $region49: #{tpu_custom_call.1} parent=5 // pred_check
        %p361 = pneg %p360
      $region50: #{tpu_custom_call.1} parent=5 // pred_check_branch
        %363 = sbr.rel (%p361) target = $region52
      $region51: #{tpu_custom_call.1} parent=5 // pred_region
        %s364 = ssub.s32 %s17, 2
        // Predicated region
        $region53: #{tpu_custom_call.1} parent=51 // pred_check
          %p365 = pneg %p122
        $region54: #{tpu_custom_call.1} parent=51 // pred_check_branch
          %367 = sbr.rel (%p365) target = $region56
        $region55: #{tpu_custom_call.1} parent=51 // pred_region
          %s368 = sand.u32 %s107, 1
          %s369 = scalar_lea.sflag [#allocation7], %s368
          %s370 = sand.u32 %s107, 1
          %s371 = smul.addr %s370, 24
          %s372 = scalar_lea.vmem [#allocation10], %s371
          %373 = dma.done %s369, 384
        $region56: #{tpu_custom_call.1} parent=51 // pred_fallthru
          _
      $region52: #{tpu_custom_call.1} parent=5 // pred_fallthru
        _
    $region6: #{tpu_custom_call.1} parent=1 // loop_footer
      %s21 = sadd.s32 1, %s17
    $region7: #{tpu_custom_call.1} parent=1 // loop_footer_branch
      %16 = sbr.rel target = $region3
    $region8: #{tpu_custom_call.1} parent=1 // loop_exit
      _
    %374 = vsyncpa [#allocation6], 1
    %s375 = scalar_lea.sflag [#allocation6], 1
    %376 = vsyncpa %s375, 1
    %377 = vsyncpa [#allocation9], 1
    %s378 = scalar_lea.sflag [#allocation9], 1
    %379 = vsyncpa %s378, 1
    %380 = vsyncpa [#allocation7], 1
    %s381 = scalar_lea.sflag [#allocation7], 1
    %382 = vsyncpa %s381, 1

</llo_original>
